<compile_context>
chip_gen: v5e
topology: v5e:2x2
jax: 0.10.0
libtpu: 0.0.40
codegen_flags: <defaults>
</compile_context>

<pallas_src>
import functools

import jax
import jax.numpy as jnp
from jax.experimental import pallas as pl
from jax.experimental.pallas import tpu as pltpu

EPS = 1e-5  # nn.BatchNorm1d default eps


def _round_up(n, m):
    return ((n + m - 1) // m) * m


# -----------------------------------------------------------------------------
# Kernel: one batch tile; all (BN-folded) weights stay VMEM-resident.
# -----------------------------------------------------------------------------
def _fc_kernel(x_ref, w1_ref, b1_ref, w2_ref, b2_ref, w3_ref, b3_ref, out_ref,
               *, num_classes):
    cdt = w1_ref.dtype  # matmul operand dtype (bf16 by default)

    # Linear1 -> ReLU            (BN1 is folded into w2/b2)
    h = jnp.dot(x_ref[...].astype(cdt), w1_ref[...],
                preferred_element_type=jnp.float32) + b1_ref[...]
    h = jnp.maximum(h, 0.0).astype(cdt)

    # Linear2 -> ReLU            (BN2 is folded into w3/b3)
    h = jnp.dot(h, w2_ref[...],
                preferred_element_type=jnp.float32) + b2_ref[...]
    h = jnp.maximum(h, 0.0).astype(cdt)

    # Linear3 -> Softmax(dim=1) over the real (un-padded) classes only.
    logits = jnp.dot(h, w3_ref[...],
                     preferred_element_type=jnp.float32) + b3_ref[...]
    col = jax.lax.broadcasted_iota(jnp.int32, logits.shape, 1)
    valid = col < num_classes
    m = jnp.max(jnp.where(valid, logits, jnp.float32(-1e30)),
                axis=1, keepdims=True)
    e = jnp.where(valid, jnp.exp(logits - m), 0.0)
    denom = jnp.sum(e, axis=1, keepdims=True)
    # Exact divide: approximate reciprocal is not accurate enough for
    # probabilities that must sum to 1.
    out_ref[...] = (e / denom).astype(out_ref.dtype)


# -----------------------------------------------------------------------------
# Parameter prep: fold eval-mode BN into the next Linear, pad H/C to 128,
# cast weights to the MXU dtype (biases stay f32).  One-time transform.
# -----------------------------------------------------------------------------
def fold_and_pad_params(p, input_size, hidden_size, num_classes,
                        weight_dtype=jnp.bfloat16):
    s1 = p["g1"] * jax.lax.rsqrt(p["v1"] + EPS)      # [1, H]
    t1 = p["be1"] - p["m1"] * s1
    s2 = p["g2"] * jax.lax.rsqrt(p["v2"] + EPS)
    t2 = p["be2"] - p["m2"] * s2

    w1 = p["w1"]
    b1 = p["b1"]
    w2 = s1.T * p["w2"]                              # scale w2's input rows by s1
    b2 = p["b2"] + t1 @ p["w2"]
    w3 = s2.T * p["w3"]
    b3 = p["b3"] + t2 @ p["w3"]

    F = input_size                                   # feature dim kept un-padded
    Hp = _round_up(hidden_size, 128)
    Cp = _round_up(num_classes, 128)

    def pad2(a, rows, cols):
        return jnp.pad(a, ((0, rows - a.shape[0]), (0, cols - a.shape[1])))

    folded = dict(
        w1=pad2(w1, F, Hp).astype(weight_dtype),
        b1=pad2(b1, 1, Hp).astype(jnp.float32),
        w2=pad2(w2, Hp, Hp).astype(weight_dtype),
        b2=pad2(b2, 1, Hp).astype(jnp.float32),
        w3=pad2(w3, Hp, Cp).astype(weight_dtype),
        b3=pad2(b3, 1, Cp).astype(jnp.float32),
    )
    folded["dims"] = (F, Hp, Cp, num_classes)
    return folded


def _vmem_limit_bytes(folded, tb, F, Hp, Cp):
    keys = ("w1", "b1", "w2", "b2", "w3", "b3")
    # Weights/biases are single-buffered (pl.Buffered(1)) -> one copy each.
    w_bytes = sum(int(folded[k].size) * folded[k].dtype.itemsize for k in keys)
    io_bytes = 2 * tb * F * 4 + 2 * tb * Cp * 4       # double-buffered x / out
    interm_bytes = tb * (2 * Hp + 2 * Cp) * 4         # f32 h1/h2/logits/exp
    est = int(1.5 * (w_bytes + io_bytes + interm_bytes)) + (4 << 20)
    try:
        cap = int(pltpu.get_tpu_info().vmem_capacity_bytes) - (8 << 20)
    except Exception:                                 # no TPU / older API
        cap = 64 << 20
    return max(min(est, cap), 32 << 20)


# -----------------------------------------------------------------------------
# Wrapper: batch-tiled 1-D grid; weights VMEM-resident via constant index maps.
# -----------------------------------------------------------------------------
def fully_connected_forward(x, folded, *, block_b=512):
    """x: [B, input_size] float. Returns [B, num_classes] softmax probs (f32)."""
    F, Hp, Cp, num_classes = folded["dims"]
    B = x.shape[0]
    assert x.shape[1] == F

    tb = max(8, min(_round_up(block_b, 8), _round_up(B, 8)))
    Bp = _round_up(B, tb)
    x_in = x if Bp == B else jnp.pad(x, ((0, Bp - B), (0, 0)))

    batch_map = lambda i: (i, 0)
    const_map = lambda i: (0, 0)

    def resident(shape):
        # Grid-invariant operand: constant index map + single buffer.  The
        # pipeline should DMA it once and keep it resident across all tiles.
        return pl.BlockSpec(shape, const_map, pipeline_mode=pl.Buffered(1))

    kernel = functools.partial(_fc_kernel, num_classes=num_classes)

    out = pl.pallas_call(
        kernel,
        out_shape=jax.ShapeDtypeStruct((Bp, Cp), jnp.float32),
        grid_spec=pltpu.PrefetchScalarGridSpec(
            num_scalar_prefetch=0,
            grid=(Bp // tb,),
            in_specs=[
                pl.BlockSpec((tb, F), batch_map),   # x tile (double-buffered)
                resident((F, Hp)),                  # w1
                resident((1, Hp)),                  # b1
                resident((Hp, Hp)),                 # w2 (BN1 folded in)
                resident((1, Hp)),                  # b2
                resident((Hp, Cp)),                 # w3 (BN2 folded in)
                resident((1, Cp)),                  # b3
            ],
            out_specs=pl.BlockSpec((tb, Cp), batch_map),
        ),
        compiler_params=pltpu.CompilerParams(
            # Batch tiles are independent -> shard across TCs where available.
            dimension_semantics=("parallel",),
            vmem_limit_bytes=_vmem_limit_bytes(folded, tb, F, Hp, Cp),
        ),
    )(x_in, folded["w1"], folded["b1"], folded["w2"], folded["b2"],
      folded["w3"], folded["b3"])

    return out[:B, :num_classes]


# -----------------------------------------------------------------------------
# Raw (torch-equivalent) parameter init + pure-JAX reference (eval mode).
# -----------------------------------------------------------------------------
def init_params(key, input_size, hidden_size, num_classes):
    ks = jax.random.split(key, 10)

    def lin(k, fin, fout):
        bound = 1.0 / jnp.sqrt(fin)
        kw, kb = jax.random.split(k)
        w = jax.random.uniform(kw, (fin, fout), jnp.float32, -bound, bound)
        b = jax.random.uniform(kb, (1, fout), jnp.float32, -bound, bound)
        return w, b

    w1, b1 = lin(ks[0], input_size, hidden_size)
    w2, b2 = lin(ks[1], hidden_size, hidden_size)
    w3, b3 = lin(ks[2], hidden_size, num_classes)
    g1 = 1.0 + 0.1 * jax.random.normal(ks[3], (1, hidden_size), jnp.float32)
    be1 = 0.1 * jax.random.normal(ks[4], (1, hidden_size), jnp.float32)
    m1 = 0.1 * jax.random.normal(ks[5], (1, hidden_size), jnp.float32)
    v1 = 1.0 + 0.1 * jax.random.uniform(ks[6], (1, hidden_size), jnp.float32)
    g2 = 1.0 + 0.1 * jax.random.normal(ks[7], (1, hidden_size), jnp.float32)
    be2 = 0.1 * jax.random.normal(ks[8], (1, hidden_size), jnp.float32)
    m2 = 0.1 * jax.random.normal(ks[9], (1, hidden_size), jnp.float32)
    v2 = 1.0 + 0.1 * jax.random.uniform(jax.random.fold_in(key, 99),
                                        (1, hidden_size), jnp.float32)
    return dict(w1=w1, b1=b1, g1=g1, be1=be1, m1=m1, v1=v1,
                w2=w2, b2=b2, g2=g2, be2=be2, m2=m2, v2=v2,
                w3=w3, b3=b3)


def reference_forward(x, p):
    h = jnp.maximum(x @ p["w1"] + p["b1"], 0.0)
    h = (h - p["m1"]) * jax.lax.rsqrt(p["v1"] + EPS) * p["g1"] + p["be1"]
    h = jnp.maximum(h @ p["w2"] + p["b2"], 0.0)
    h = (h - p["m2"]) * jax.lax.rsqrt(p["v2"] + EPS) * p["g2"] + p["be2"]
    logits = h @ p["w3"] + p["b3"]
    return jax.nn.softmax(logits, axis=1)


if __name__ == "__main__":
    B, INPUT, HIDDEN, CLASSES = 64, 32, 32, 16
    key = jax.random.PRNGKey(0)
    kx, kp = jax.random.split(key)
    x = jax.random.normal(kx, (B, INPUT), jnp.float32)
    raw = init_params(kp, INPUT, HIDDEN, CLASSES)

    folded = fold_and_pad_params(raw, INPUT, HIDDEN, CLASSES)
    # block_b=32 -> grid of 2 batch tiles (exercises the pipelined grid).
    out = fully_connected_forward(x, folded, block_b=32)
    out = jax.block_until_ready(out)

    assert out.shape == (B, CLASSES)
    # Exact softmax normalization -> rows sum to 1 up to f32 rounding.
    assert jnp.allclose(jnp.sum(out, axis=1), 1.0, atol=1e-4)
    # Matches the unfused f32 eval-mode reference (tolerance for bf16 matmuls).
    ref = reference_forward(x, raw)
    assert jnp.allclose(out, ref, atol=1e-2, rtol=1e-2), \
        float(jnp.max(jnp.abs(out - ref)))

    print("KERNEL_OK")
</pallas_src>

<mosaic_0001>
module attributes {stable_mosaic.version = 11 : i64} {
  func.func @_fc_kernel(%arg0: i32, %arg1: memref<32x32xf32, #tpu.memory_space<vmem>>, %arg2: memref<32x128xbf16, #tpu.memory_space<vmem>>, %arg3: memref<1x128xf32, #tpu.memory_space<vmem>>, %arg4: memref<128x128xbf16, #tpu.memory_space<vmem>>, %arg5: memref<1x128xf32, #tpu.memory_space<vmem>>, %arg6: memref<128x128xbf16, #tpu.memory_space<vmem>>, %arg7: memref<1x128xf32, #tpu.memory_space<vmem>>, %arg8: memref<32x128xf32, #tpu.memory_space<vmem>>) attributes {dimension_semantics = [#tpu.dimension_semantics<parallel>], iteration_bounds = array<i64: 2>, scalar_prefetch = 0 : i64, scratch_operands = 0 : i64, tpu.core_type = #tpu.core_type<tc>, window_params = [{transform_indices = @transform_0, window_bounds = array<i64: 32, 32>}, {pipeline_mode = #tpu.pipeline_mode<synchronous>, transform_indices = @transform_1, window_bounds = array<i64: 32, 128>}, {pipeline_mode = #tpu.pipeline_mode<synchronous>, transform_indices = @transform_2, window_bounds = array<i64: 1, 128>}, {pipeline_mode = #tpu.pipeline_mode<synchronous>, transform_indices = @transform_3, window_bounds = array<i64: 128, 128>}, {pipeline_mode = #tpu.pipeline_mode<synchronous>, transform_indices = @transform_4, window_bounds = array<i64: 1, 128>}, {pipeline_mode = #tpu.pipeline_mode<synchronous>, transform_indices = @transform_5, window_bounds = array<i64: 128, 128>}, {pipeline_mode = #tpu.pipeline_mode<synchronous>, transform_indices = @transform_6, window_bounds = array<i64: 1, 128>}, {transform_indices = @transform_7, window_bounds = array<i64: 32, 128>}]} {
    %c0 = arith.constant 0 : index
    %c0_0 = arith.constant 0 : index
    %0 = vector.load %arg1[%c0, %c0_0] : memref<32x32xf32, #tpu.memory_space<vmem>>, vector<32x32xf32>
    %1 = arith.truncf %0 : vector<32x32xf32> to vector<32x32xbf16>
    %c0_1 = arith.constant 0 : index
    %c0_2 = arith.constant 0 : index
    %2 = vector.load %arg2[%c0_1, %c0_2] : memref<32x128xbf16, #tpu.memory_space<vmem>>, vector<32x128xbf16>
    %cst = arith.constant dense<0.000000e+00> : vector<32x128xf32>
    %3 = tpu.matmul %1, %2, %cst {dimension_numbers = #tpu.dot_dimension_numbers<[1], [0], [0], [1], [0, 0, 1, 1], [], []>} : vector<32x32xbf16>, vector<32x128xbf16>, vector<32x128xf32> -> vector<32x128xf32>
    %c0_3 = arith.constant 0 : index
    %c0_4 = arith.constant 0 : index
    %4 = vector.load %arg3[%c0_3, %c0_4] : memref<1x128xf32, #tpu.memory_space<vmem>>, vector<1x128xf32>
    %5 = vector.broadcast %4 : vector<1x128xf32> to vector<32x128xf32>
    %6 = arith.addf %3, %5 : vector<32x128xf32>
    %cst_5 = arith.constant 0.000000e+00 : f32
    %7 = vector.broadcast %cst_5 : f32 to vector<32x128xf32>
    %8 = arith.maximumf %6, %7 : vector<32x128xf32>
    %9 = arith.truncf %8 : vector<32x128xf32> to vector<32x128xbf16>
    %c0_6 = arith.constant 0 : index
    %c0_7 = arith.constant 0 : index
    %10 = vector.load %arg4[%c0_6, %c0_7] : memref<128x128xbf16, #tpu.memory_space<vmem>>, vector<128x128xbf16>
    %cst_8 = arith.constant dense<0.000000e+00> : vector<32x128xf32>
    %11 = tpu.matmul %9, %10, %cst_8 {dimension_numbers = #tpu.dot_dimension_numbers<[1], [0], [0], [1], [0, 0, 1, 1], [], []>} : vector<32x128xbf16>, vector<128x128xbf16>, vector<32x128xf32> -> vector<32x128xf32>
    %c0_9 = arith.constant 0 : index
    %c0_10 = arith.constant 0 : index
    %12 = vector.load %arg5[%c0_9, %c0_10] : memref<1x128xf32, #tpu.memory_space<vmem>>, vector<1x128xf32>
    %13 = vector.broadcast %12 : vector<1x128xf32> to vector<32x128xf32>
    %14 = arith.addf %11, %13 : vector<32x128xf32>
    %cst_11 = arith.constant 0.000000e+00 : f32
    %15 = vector.broadcast %cst_11 : f32 to vector<32x128xf32>
    %16 = arith.maximumf %14, %15 : vector<32x128xf32>
    %17 = arith.truncf %16 : vector<32x128xf32> to vector<32x128xbf16>
    %c0_12 = arith.constant 0 : index
    %c0_13 = arith.constant 0 : index
    %18 = vector.load %arg6[%c0_12, %c0_13] : memref<128x128xbf16, #tpu.memory_space<vmem>>, vector<128x128xbf16>
    %cst_14 = arith.constant dense<0.000000e+00> : vector<32x128xf32>
    %19 = tpu.matmul %17, %18, %cst_14 {dimension_numbers = #tpu.dot_dimension_numbers<[1], [0], [0], [1], [0, 0, 1, 1], [], []>} : vector<32x128xbf16>, vector<128x128xbf16>, vector<32x128xf32> -> vector<32x128xf32>
    %c0_15 = arith.constant 0 : index
    %c0_16 = arith.constant 0 : index
    %20 = vector.load %arg7[%c0_15, %c0_16] : memref<1x128xf32, #tpu.memory_space<vmem>>, vector<1x128xf32>
    %21 = vector.broadcast %20 : vector<1x128xf32> to vector<32x128xf32>
    %22 = arith.addf %19, %21 : vector<32x128xf32>
    %23 = tpu.iota {dimensions = array<i32: 1>} : vector<32x128xi32>
    %c16_i32 = arith.constant 16 : i32
    %24 = vector.broadcast %c16_i32 : i32 to vector<32x128xi32>
    %25 = arith.cmpi slt, %23, %24 : vector<32x128xi32>
    %cst_17 = arith.constant -1.000000e+30 : f32
    %26 = vector.broadcast %cst_17 : f32 to vector<32x128xf32>
    %27 = arith.select %25, %22, %26 : vector<32x128xi1>, vector<32x128xf32>
    %cst_18 = arith.constant dense<0xFF800000> : vector<32xf32>
    %28 = vector.multi_reduction <maximumf>, %27, %cst_18 [1] : vector<32x128xf32> to vector<32xf32>
    %29 = vector.shape_cast %28 : vector<32xf32> to vector<32x1xf32>
    %30 = vector.broadcast %29 : vector<32x1xf32> to vector<32x128xf32>
    %31 = arith.subf %22, %30 : vector<32x128xf32>
    %32 = math.exp %31 : vector<32x128xf32>
    %cst_19 = arith.constant 0.000000e+00 : f32
    %33 = vector.broadcast %cst_19 : f32 to vector<32x128xf32>
    %34 = arith.select %25, %32, %33 : vector<32x128xi1>, vector<32x128xf32>
    %cst_20 = arith.constant dense<0.000000e+00> : vector<32xf32>
    %35 = vector.multi_reduction <add>, %34, %cst_20 [1] : vector<32x128xf32> to vector<32xf32>
    %36 = vector.shape_cast %35 : vector<32xf32> to vector<32x1xf32>
    %37 = vector.broadcast %36 : vector<32x1xf32> to vector<32x128xf32>
    %38 = arith.divf %34, %37 : vector<32x128xf32>
    %c0_21 = arith.constant 0 : index
    %c0_22 = arith.constant 0 : index
    %39 = vector.load %arg8[%c0_21, %c0_22] : memref<32x128xf32, #tpu.memory_space<vmem>>, vector<32x128xf32>
    tpu.vector_store %arg8[%c0_21, %c0_22], %38 {strides = array<i32>} : memref<32x128xf32, #tpu.memory_space<vmem>>, vector<32x128xf32>,
    return
  }
  func.func @transform_0(%arg0: i32) -> (i32, i32) {
    %c0_i32 = arith.constant 0 : i32
    %c0_i32_0 = arith.constant 0 : i32
    return %arg0, %c0_i32 : i32, i32
  }
  func.func @transform_1(%arg0: i32) -> (i32, i32) {
    %c0_i32 = arith.constant 0 : i32
    %c0_i32_0 = arith.constant 0 : i32
    %c0_i32_1 = arith.constant 0 : i32
    return %c0_i32, %c0_i32_0 : i32, i32
  }
  func.func @transform_2(%arg0: i32) -> (i32, i32) {
    %c0_i32 = arith.constant 0 : i32
    %c0_i32_0 = arith.constant 0 : i32
    %c0_i32_1 = arith.constant 0 : i32
    return %c0_i32, %c0_i32_0 : i32, i32
  }
  func.func @transform_3(%arg0: i32) -> (i32, i32) {
    %c0_i32 = arith.constant 0 : i32
    %c0_i32_0 = arith.constant 0 : i32
    %c0_i32_1 = arith.constant 0 : i32
    return %c0_i32, %c0_i32_0 : i32, i32
  }
  func.func @transform_4(%arg0: i32) -> (i32, i32) {
    %c0_i32 = arith.constant 0 : i32
    %c0_i32_0 = arith.constant 0 : i32
    %c0_i32_1 = arith.constant 0 : i32
    return %c0_i32, %c0_i32_0 : i32, i32
  }
  func.func @transform_5(%arg0: i32) -> (i32, i32) {
    %c0_i32 = arith.constant 0 : i32
    %c0_i32_0 = arith.constant 0 : i32
    %c0_i32_1 = arith.constant 0 : i32
    return %c0_i32, %c0_i32_0 : i32, i32
  }
  func.func @transform_6(%arg0: i32) -> (i32, i32) {
    %c0_i32 = arith.constant 0 : i32
    %c0_i32_0 = arith.constant 0 : i32
    %c0_i32_1 = arith.constant 0 : i32
    return %c0_i32, %c0_i32_0 : i32, i32
  }
  func.func @transform_7(%arg0: i32) -> (i32, i32) {
    %c0_i32 = arith.constant 0 : i32
    %c0_i32_0 = arith.constant 0 : i32
    return %arg0, %c0_i32 : i32, i32
  }
}

</mosaic_0001>

<llo_original>
// kernel: tpu_custom_call.1
$region0: #{tpu_custom_call.1}
  #allocation0 [shape = 'u32[]', space=smem, size = 0x4, offset = 0x4, fixed_abs, tag = 'smem constant byte address 0x4 - core index']
  #allocation1 [shape = 'u32[72,128]{1,0:T(1,128)}', space=vmem, size = 0x9000, scoped, tag = 'internal scratch']
  %s0 = inlined_call_operand.vmem [shape: f32[64,32], index: 0, kind: input, shape index: {}]
  %s1 = inlined_call_operand.vmem [shape: bf16[32,128], index: 1, kind: input, shape index: {}]
  %s2 = inlined_call_operand.vmem [shape: f32[1,128], index: 2, kind: input, shape index: {}]
  %s3 = inlined_call_operand.vmem [shape: bf16[128,128], index: 3, kind: input, shape index: {}]
  %s4 = inlined_call_operand.vmem [shape: f32[1,128], index: 4, kind: input, shape index: {}]
  %s5 = inlined_call_operand.hbm [shape: bf16[128,128], index: 5, kind: input, shape index: {}]
  %s6 = inlined_call_operand.vmem [shape: f32[1,128], index: 6, kind: input, shape index: {}]
  %s7 = inlined_call_operand.hbm [shape: f32[64,128], index: 7, kind: output, shape index: {}]
  %s8 = sld [smem:[#allocation0]]
  $region65: #{tpu_custom_call.1} parent=0
    _
  %s10 = ssub.s32 1, %s8
  %s11 = scalar_select 0, %s10, %s8
  $region1: #{tpu_custom_call.1} parent=0
    #allocation2 [shape = 'u8[32768]{0}', space=vmem, size = 0x8000, scoped, tag = 'input window, operand 5, single buffered']
    #allocation3 [shape = 's32[2]{0}', space=sflag, size = 0x8, scoped, tag = 'scoped memory for tpu_custom_call.1']
    #allocation4 [shape = 's32[2]{0}', space=sflag, size = 0x8, scoped, tag = 'scoped memory for tpu_custom_call.1']
    #allocation5 [shape = 'u8[32768]{0}', space=vmem, size = 0x8000, scoped, tag = 'output window, operand 0']
    %12 = vsyncpa [#allocation3], 0
    %13 = vsyncpa [#allocation4], 0
    %s14 = scalar_lea.sflag [#allocation4], 1
    %15 = vsyncpa %s14, 0
    loop: start=0, step=1, limit=4
    $region2: #{tpu_custom_call.1} parent=1 // loop_pre_header
      _
    $region3: #{tpu_custom_call.1} parent=1 // loop_header
      %s17 = sphi 0, %s21
      %p18 = scmp.ge.s32.totalorder %s17, 4
      %s27 = sphi 0, %s29
      %s30 = sphi 0, %s27
      %s31 = sphi 0, %s30
      %s47 = sphi 0, %s31
      %s51 = sphi 0, %s51
      %s53 = sphi 0, %s51
      %s54 = sphi 0, %s53
      %s68 = sphi 0, %s54
      %s72 = sphi 0, %s72
      %s74 = sphi 0, %s72
      %s75 = sphi 0, %s74
      %s89 = sphi 0, %s75
      %s93 = sphi 0, %s93
      %s95 = sphi 0, %s93
      %s96 = sphi 0, %s95
      %s110 = sphi 0, %s96
      %s114 = sphi 0, %s114
      %s116 = sphi 0, %s114
      %s117 = sphi 0, %s116
      %s131 = sphi 0, %s117
      %s135 = sphi 0, %s135
      %s137 = sphi 0, %s135
      %s138 = sphi 0, %s137
      %s152 = sphi 0, %s138
      %s156 = sphi 0, %s156
      %s158 = sphi 0, %s156
      %s159 = sphi 0, %s158
      %s173 = sphi 0, %s159
      %s179 = sphi 0, %s181
      %s182 = sphi 0, %s179
      %s183 = sphi 0, %s182
      %s199 = sphi 0, %s183
    $region4: #{tpu_custom_call.1} parent=1 // loop_header_branch
      %20 = sbr.rel (%p18) target = $region8
    $region5: #{tpu_custom_call.1} parent=1 // loop_body
      %s22 = ssub.s32 %s17, 1
      %s23 = ssub.s32 %s17, 2
      %s24 = sadd.s32 %s17, 1
      %s25 = ssub.s32 %s17, %s24
      %p26 = scmp.eq.s32.totalorder %s25, 0
      %s28 = sadd.s32 %s27, 1
      %s29 = scalar_select %p26, %s27, %s28
      %p32 = pneg %p26
      %p33 = scmp.eq.s32.totalorder %s17, 1
      %p34 = por %p32, %p33
      %p35 = scmp.ne.s32.totalorder %s27, %s30
      %p36 = scmp.eq.s32.totalorder %s17, 0
      %p37 = por %p35, %p36
      %p38 = scmp.ne.s32.totalorder %s27, %s30
      %p39 = scmp.eq.s32.totalorder %s22, 1
      %p40 = por %p38, %p39
      %p41 = scmp.ne.s32.totalorder %s30, %s31
      %p42 = scmp.eq.s32.totalorder %s22, 0
      %p43 = por %p41, %p42
      %p44 = scmp.ne.s32.totalorder %s30, %s31
      %p45 = scmp.eq.s32.totalorder %s23, 1
      %p46 = por %p44, %p45
      %p48 = scmp.ne.s32.totalorder %s31, %s47
      %p49 = scmp.eq.s32.totalorder %s23, 0
      %p50 = por %p48, %p49
      %s52 = sadd.s32 %s51, 1
      %p55 = scmp.eq.s32.totalorder %s17, 1
      %p56 = scmp.ne.s32.totalorder %s51, %s53
      %p57 = scmp.eq.s32.totalorder %s17, 0
      %p58 = por %p56, %p57
      %p59 = scmp.ne.s32.totalorder %s51, %s53
      %p60 = scmp.eq.s32.totalorder %s22, 1
      %p61 = por %p59, %p60
      %p62 = scmp.ne.s32.totalorder %s53, %s54
      %p63 = scmp.eq.s32.totalorder %s22, 0
      %p64 = por %p62, %p63
      %p65 = scmp.ne.s32.totalorder %s53, %s54
      %p66 = scmp.eq.s32.totalorder %s23, 1
      %p67 = por %p65, %p66
      %p69 = scmp.ne.s32.totalorder %s54, %s68
      %p70 = scmp.eq.s32.totalorder %s23, 0
      %p71 = por %p69, %p70
      %s73 = sadd.s32 %s72, 1
      %p76 = scmp.eq.s32.totalorder %s17, 1
      %p77 = scmp.ne.s32.totalorder %s72, %s74
      %p78 = scmp.eq.s32.totalorder %s17, 0
      %p79 = por %p77, %p78
      %p80 = scmp.ne.s32.totalorder %s72, %s74
      %p81 = scmp.eq.s32.totalorder %s22, 1
      %p82 = por %p80, %p81
      %p83 = scmp.ne.s32.totalorder %s74, %s75
      %p84 = scmp.eq.s32.totalorder %s22, 0
      %p85 = por %p83, %p84
      %p86 = scmp.ne.s32.totalorder %s74, %s75
      %p87 = scmp.eq.s32.totalorder %s23, 1
      %p88 = por %p86, %p87
      %p90 = scmp.ne.s32.totalorder %s75, %s89
      %p91 = scmp.eq.s32.totalorder %s23, 0
      %p92 = por %p90, %p91
      %s94 = sadd.s32 %s93, 1
      %p97 = scmp.eq.s32.totalorder %s17, 1
      %p98 = scmp.ne.s32.totalorder %s93, %s95
      %p99 = scmp.eq.s32.totalorder %s17, 0
      %p100 = por %p98, %p99
      %p101 = scmp.ne.s32.totalorder %s93, %s95
      %p102 = scmp.eq.s32.totalorder %s22, 1
      %p103 = por %p101, %p102
      %p104 = scmp.ne.s32.totalorder %s95, %s96
      %p105 = scmp.eq.s32.totalorder %s22, 0
      %p106 = por %p104, %p105
      %p107 = scmp.ne.s32.totalorder %s95, %s96
      %p108 = scmp.eq.s32.totalorder %s23, 1
      %p109 = por %p107, %p108
      %p111 = scmp.ne.s32.totalorder %s96, %s110
      %p112 = scmp.eq.s32.totalorder %s23, 0
      %p113 = por %p111, %p112
      %s115 = sadd.s32 %s114, 1
      %p118 = scmp.eq.s32.totalorder %s17, 1
      %p119 = scmp.ne.s32.totalorder %s114, %s116
      %p120 = scmp.eq.s32.totalorder %s17, 0
      %p121 = por %p119, %p120
      %p122 = scmp.ne.s32.totalorder %s114, %s116
      %p123 = scmp.eq.s32.totalorder %s22, 1
      %p124 = por %p122, %p123
      %p125 = scmp.ne.s32.totalorder %s116, %s117
      %p126 = scmp.eq.s32.totalorder %s22, 0
      %p127 = por %p125, %p126
      %p128 = scmp.ne.s32.totalorder %s116, %s117
      %p129 = scmp.eq.s32.totalorder %s23, 1
      %p130 = por %p128, %p129
      %p132 = scmp.ne.s32.totalorder %s117, %s131
      %p133 = scmp.eq.s32.totalorder %s23, 0
      %p134 = por %p132, %p133
      %s136 = sadd.s32 %s135, 1
      %p139 = scmp.eq.s32.totalorder %s17, 1
      %p140 = scmp.ne.s32.totalorder %s135, %s137
      %p141 = scmp.eq.s32.totalorder %s17, 0
      %p142 = por %p140, %p141
      %p143 = scmp.ne.s32.totalorder %s135, %s137
      %p144 = scmp.eq.s32.totalorder %s22, 1
      %p145 = por %p143, %p144
      %p146 = scmp.ne.s32.totalorder %s137, %s138
      %p147 = scmp.eq.s32.totalorder %s22, 0
      %p148 = por %p146, %p147
      %p149 = scmp.ne.s32.totalorder %s137, %s138
      %p150 = scmp.eq.s32.totalorder %s23, 1
      %p151 = por %p149, %p150
      %p153 = scmp.ne.s32.totalorder %s138, %s152
      %p154 = scmp.eq.s32.totalorder %s23, 0
      %p155 = por %p153, %p154
      %s157 = sadd.s32 %s156, 1
      %p160 = scmp.eq.s32.totalorder %s17, 1
      %p161 = scmp.ne.s32.totalorder %s156, %s158
      %p162 = scmp.eq.s32.totalorder %s17, 0
      %p163 = por %p161, %p162
      %p164 = scmp.ne.s32.totalorder %s156, %s158
      %p165 = scmp.eq.s32.totalorder %s22, 1
      %p166 = por %p164, %p165
      %p167 = scmp.ne.s32.totalorder %s158, %s159
      %p168 = scmp.eq.s32.totalorder %s22, 0
      %p169 = por %p167, %p168
      %p170 = scmp.ne.s32.totalorder %s158, %s159
      %p171 = scmp.eq.s32.totalorder %s23, 1
      %p172 = por %p170, %p171
      %p174 = scmp.ne.s32.totalorder %s159, %s173
      %p175 = scmp.eq.s32.totalorder %s23, 0
      %p176 = por %p174, %p175
      %s177 = ssub.s32 %s17, %s24
      %p178 = scmp.eq.s32.totalorder %s177, 0
      %s180 = sadd.s32 %s179, 1
      %s181 = scalar_select %p178, %s179, %s180
      %p184 = pneg %p178
      %p185 = scmp.eq.s32.totalorder %s17, 1
      %p186 = por %p184, %p185
      %p187 = scmp.ne.s32.totalorder %s179, %s182
      %p188 = scmp.eq.s32.totalorder %s17, 0
      %p189 = por %p187, %p188
      %p190 = scmp.ne.s32.totalorder %s179, %s182
      %p191 = scmp.eq.s32.totalorder %s22, 1
      %p192 = por %p190, %p191
      %p193 = scmp.ne.s32.totalorder %s182, %s183
      %p194 = scmp.eq.s32.totalorder %s22, 0
      %p195 = por %p193, %p194
      %p196 = scmp.ne.s32.totalorder %s182, %s183
      %p197 = scmp.eq.s32.totalorder %s23, 1
      %p198 = por %p196, %p197
      %p200 = scmp.ne.s32.totalorder %s183, %s199
      %p201 = scmp.eq.s32.totalorder %s23, 0
      %p202 = por %p200, %p201
      %p203 = scmp.le.s32.totalorder 1, %s17
      %p204 = scmp.lt.s32.totalorder %s17, 3
      %p205 = pnand %p203, %p204
      %p206 = pneg %p205
      // Predicated region
      $region9: #{tpu_custom_call.1} parent=5 // pred_check
        _
      $region10: #{tpu_custom_call.1} parent=5 // pred_check_branch
        %208 = sbr.rel (%p205) target = $region12
      $region11: #{tpu_custom_call.1} parent=5 // pred_region
        %s209 = ssub.s32 %s17, 1
        // Predicated region
        $region13: #{tpu_custom_call.1} parent=11 // pred_check
          %p210 = pneg %p64
        $region14: #{tpu_custom_call.1} parent=11 // pred_check_branch
          %212 = sbr.rel (%p210) target = $region16
        $region15: #{tpu_custom_call.1} parent=11 // pred_region
          _
        $region16: #{tpu_custom_call.1} parent=11 // pred_fallthru
          _
        // Predicated region
        $region17: #{tpu_custom_call.1} parent=11 // pred_check
          %p213 = pneg %p85
        $region18: #{tpu_custom_call.1} parent=11 // pred_check_branch
          %215 = sbr.rel (%p213) target = $region20
        $region19: #{tpu_custom_call.1} parent=11 // pred_region
          _
        $region20: #{tpu_custom_call.1} parent=11 // pred_fallthru
          _
        // Predicated region
        $region21: #{tpu_custom_call.1} parent=11 // pred_check
          %p216 = pneg %p106
        $region22: #{tpu_custom_call.1} parent=11 // pred_check_branch
          %218 = sbr.rel (%p216) target = $region24
        $region23: #{tpu_custom_call.1} parent=11 // pred_region
          _
        $region24: #{tpu_custom_call.1} parent=11 // pred_fallthru
          _
        // Predicated region
        $region25: #{tpu_custom_call.1} parent=11 // pred_check
          %p219 = pneg %p127
        $region26: #{tpu_custom_call.1} parent=11 // pred_check_branch
          %221 = sbr.rel (%p219) target = $region28
        $region27: #{tpu_custom_call.1} parent=11 // pred_region
          _
        $region28: #{tpu_custom_call.1} parent=11 // pred_fallthru
          _
        // Predicated region
        $region29: #{tpu_custom_call.1} parent=11 // pred_check
          %p222 = pneg %p148
        $region30: #{tpu_custom_call.1} parent=11 // pred_check_branch
          %224 = sbr.rel (%p222) target = $region32
        $region31: #{tpu_custom_call.1} parent=11 // pred_region
          %226 = vsyncadd [#allocation3], 0
          %s227 = sshll.u32 %s5, 4
          %s228 = int_to_ptr.hbm [resolvable:$true] %s227
          %s229 = sshll.u32 [#allocation2], 4
          %s230 = int_to_ptr.vmem [resolvable:$true] %s229
          %235 = dma.hbm_to_vmem [thread:$0]  %s228, 1024, %s230, [#allocation3], 64, 64, 4
        $region32: #{tpu_custom_call.1} parent=11 // pred_fallthru
          _
        // Predicated region
        $region33: #{tpu_custom_call.1} parent=11 // pred_check
          %p236 = pneg %p169
        $region34: #{tpu_custom_call.1} parent=11 // pred_check_branch
          %238 = sbr.rel (%p236) target = $region36
        $region35: #{tpu_custom_call.1} parent=11 // pred_region
          _
        $region36: #{tpu_custom_call.1} parent=11 // pred_fallthru
          _
      $region12: #{tpu_custom_call.1} parent=5 // pred_fallthru
        _
      %p239 = scmp.lt.s32.totalorder %s17, 2
      // Predicated region
      $region37: #{tpu_custom_call.1} parent=5 // pred_check
        %p240 = pneg %p239
      $region38: #{tpu_custom_call.1} parent=5 // pred_check_branch
        %242 = sbr.rel (%p240) target = $region40
      $region39: #{tpu_custom_call.1} parent=5 // pred_region
        // Predicated region
        $region41: #{tpu_custom_call.1} parent=39 // pred_check
          %p243 = pneg %p37
        $region42: #{tpu_custom_call.1} parent=39 // pred_check_branch
          %245 = sbr.rel (%p243) target = $region44
        $region43: #{tpu_custom_call.1} parent=39 // pred_region
          %s246 = smul.u32 4, %s17
          %p247 = scmp.lt.s32.totalorder %s246, 7
          %s248 = scalar_select %p247, %s246, 7
          %s249 = smul.addr %s248, 8
          %s250 = scalar_lea.vmem %s0, %s249
          %s251 = smul.u32 4, %s17
        $region44: #{tpu_custom_call.1} parent=39 // pred_fallthru
          _
      $region40: #{tpu_custom_call.1} parent=5 // pred_fallthru
        _
      %p252 = scmp.le.s32.totalorder 1, %s17
      %p253 = scmp.lt.s32.totalorder %s17, 3
      %p254 = pnand %p252, %p253
      %p255 = pneg %p254
      // Predicated region
      $region45: #{tpu_custom_call.1} parent=5 // pred_check
        _
      $region46: #{tpu_custom_call.1} parent=5 // pred_check_branch
        %257 = sbr.rel (%p254) target = $region48
      $region47: #{tpu_custom_call.1} parent=5 // pred_region
        %s258 = ssub.s32 %s17, 1
        // Predicated region
        $region49: #{tpu_custom_call.1} parent=47 // pred_check
          %p259 = pneg %p148
        $region50: #{tpu_custom_call.1} parent=47 // pred_check_branch
          %261 = sbr.rel (%p259) target = $region52
        $region51: #{tpu_custom_call.1} parent=47 // pred_region
          %263 = dma.done [#allocation3], 1024
        $region52: #{tpu_custom_call.1} parent=47 // pred_fallthru
          _
        %s264 = smul.u32 4, %s22
        %p265 = scmp.lt.s32.totalorder %s264, 7
        %s266 = scalar_select %p265, %s264, 7
        %s267 = smul.addr %s266, 8
        %s268 = scalar_lea.vmem %s0, %s267
        %p269 = pneg %p43
        %p270 = pneg %p40
        %p271 = pneg %p64
        %p272 = pneg %p61
        %p273 = pneg %p85
        %p274 = pneg %p82
        %p275 = pneg %p106
        %p276 = pneg %p103
        %p277 = pneg %p127
        %p278 = pneg %p124
        %p279 = pneg %p148
        %p280 = pneg %p145
        %p281 = pneg %p169
        %p282 = pneg %p166
        %p283 = pneg %p195
        %p284 = pneg %p192
        %s285 = sand.u32 %s182, 1
        %s286 = scalar_lea.sflag [#allocation4], %s285
        %s287 = sand.u32 %s182, 1
        %s288 = smul.addr %s287, 32
        %s289 = scalar_lea.vmem [#allocation5], %s288
        %s290 = smul.u32 4, %s22
        %p291 = scmp.lt.s32.totalorder %s290, 7
        %s292 = scalar_select %p291, %s290, 7
        %s293 = smul.addr %s292, 8
        %s294 = scalar_lea.vmem %s0, %s293
        %s295 = smul.u32 4, %s22
        %s296 = smul.u32 4, %s22
        %v298 = vld [vmem:[%s294] sm:$0xff]
        %v299 = vld [vmem:[%s294 + $0x8] sm:$0xff]
        %v300 = vld [vmem:[%s294 + $0x10] sm:$0xff]
        %v301 = vld [vmem:[%s294 + $0x18] sm:$0xff]
        %v302 = vpack.c.bf16 %v299, %v298
        %v303 = vpack.c.bf16 %v301, %v300
        %v304 = vld [vmem:[%s1] sm:$0xf]
        %v305 = vld [vmem:[%s1 + $0x4] sm:$0xf]
        %v306 = vld [vmem:[%s1 + $0x8] sm:$0xf]
        %v307 = vld [vmem:[%s1 + $0xc] sm:$0xf]
        %v308 = vld [vmem:[%s2] sm:$0x1]
        %v310 = vperm.slane %v308, 0
        %v316 = vunpack.c.l.b16 %v304
        %v317 = vunpack.c.l.b16 %v305
        %v318 = vunpack.c.l.b16 %v306
        %v319 = vunpack.c.l.b16 %v307
        %v320 = vpack.c.b16 %v317, %v316
        %v321 = vpack.c.b16 %v319, %v318
        %vm324 = vcmask 261120
        %v326 = vsel %vm324, %v302, 0
        %v329 = vsel %vm324, %v303, 0
        %331 = vmatpush.bf16.msra.mxu0 0
        %332 = vmatpush.bf16.msra.mxu0 0
        %333 = vmatpush.bf16.msra.mxu0 0
        %334 = vmatpush.bf16.msra.mxu0 0
        %335 = vmatpush.bf16.msra.mxu0 0
        %336 = vmatpush.bf16.msra.mxu0 0
        %337 = vmatpush.bf16.msra.mxu0 %v321
        %338 = vmatpush.bf16.msra.mxu0 %v320
        %339 = vmatmul.bf16.gmra.mxu0 %v326
        %v340 = vpop.f32.mrf.mxu0
        %v341 = vadd.f32 %v310, %v340
        %v342 = vpop.f32.mrf.mxu0
        %v343 = vadd.f32 %v310, %v342
        %344 = vmatmul.bf16.gmra.mxu0 %v329
        %v345 = vpop.f32.mrf.mxu0
        %v346 = vadd.f32 %v310, %v345
        %v347 = vpop.f32.mrf.mxu0
        %v348 = vadd.f32 %v310, %v347
        %349 = vdwg.mxu0
        %v350 = vmax.f32 %v341, 0.0
        %v351 = vmax.f32 %v343, 0.0
        %v352 = vmax.f32 %v346, 0.0
        %v353 = vmax.f32 %v348, 0.0
        %v354 = vpack.c.bf16 %v351, %v350
        %v355 = vpack.c.bf16 %v353, %v352
        %v356 = vld [vmem:[%s3] sm:$0xf]
        %v357 = vld [vmem:[%s3 + $0x4] sm:$0xf]
        %v358 = vld [vmem:[%s3 + $0x8] sm:$0xf]
        %v359 = vld [vmem:[%s3 + $0xc] sm:$0xf]
        %v360 = vld [vmem:[%s3 + $0x10] sm:$0xf]
        %v361 = vld [vmem:[%s3 + $0x14] sm:$0xf]
        %v362 = vld [vmem:[%s3 + $0x18] sm:$0xf]
        %v363 = vld [vmem:[%s3 + $0x1c] sm:$0xf]
        %v364 = vld [vmem:[%s3 + $0x20] sm:$0xf]
        %v365 = vld [vmem:[%s3 + $0x24] sm:$0xf]
        %v366 = vld [vmem:[%s3 + $0x28] sm:$0xf]
        %v367 = vld [vmem:[%s3 + $0x2c] sm:$0xf]
        %v368 = vld [vmem:[%s3 + $0x30] sm:$0xf]
        %v369 = vld [vmem:[%s3 + $0x34] sm:$0xf]
        %v370 = vld [vmem:[%s3 + $0x38] sm:$0xf]
        %v371 = vld [vmem:[%s3 + $0x3c] sm:$0xf]
        %v372 = vld [vmem:[%s4] sm:$0x1]
        %v374 = vperm.slane %v372, 0
        %v392 = vunpack.c.l.b16 %v356
        %v393 = vunpack.c.l.b16 %v357
        %v394 = vunpack.c.l.b16 %v358
        %v395 = vunpack.c.l.b16 %v359
        %v396 = vunpack.c.l.b16 %v360
        %v397 = vunpack.c.l.b16 %v361
        %v398 = vunpack.c.l.b16 %v362
        %v399 = vunpack.c.l.b16 %v363
        %v400 = vunpack.c.l.b16 %v364
        %v401 = vunpack.c.l.b16 %v365
        %v402 = vunpack.c.l.b16 %v366
        %v403 = vunpack.c.l.b16 %v367
        %v404 = vunpack.c.l.b16 %v368
        %v405 = vunpack.c.l.b16 %v369
        %v406 = vunpack.c.l.b16 %v370
        %v407 = vunpack.c.l.b16 %v371
        %v408 = vpack.c.b16 %v393, %v392
        %v409 = vpack.c.b16 %v395, %v394
        %v410 = vpack.c.b16 %v397, %v396
        %v411 = vpack.c.b16 %v399, %v398
        %v412 = vpack.c.b16 %v401, %v400
        %v413 = vpack.c.b16 %v403, %v402
        %v414 = vpack.c.b16 %v405, %v404
        %v415 = vpack.c.b16 %v407, %v406
        %424 = vmatpush.bf16.msra.mxu0 %v415
        %425 = vmatpush.bf16.msra.mxu0 %v414
        %426 = vmatpush.bf16.msra.mxu0 %v413
        %427 = vmatpush.bf16.msra.mxu0 %v412
        %428 = vmatpush.bf16.msra.mxu0 %v411
        %429 = vmatpush.bf16.msra.mxu0 %v410
        %430 = vmatpush.bf16.msra.mxu0 %v409
        %431 = vmatpush.bf16.msra.mxu0 %v408
        %432 = vmatmul.bf16.gmra.mxu0 %v354
        %v433 = vpop.f32.mrf.mxu0
        %v434 = vadd.f32 %v374, %v433
        %v435 = vpop.f32.mrf.mxu0
        %v436 = vadd.f32 %v374, %v435
        %437 = vmatmul.bf16.gmra.mxu0 %v355
        %v438 = vpop.f32.mrf.mxu0
        %v439 = vadd.f32 %v374, %v438
        %v440 = vpop.f32.mrf.mxu0
        %v441 = vadd.f32 %v374, %v440
        %442 = vdwg.mxu0
        %v443 = vmax.f32 %v434, 0.0
        %v444 = vmax.f32 %v436, 0.0
        %v445 = vmax.f32 %v439, 0.0
        %v446 = vmax.f32 %v441, 0.0
        %v447 = vpack.c.bf16 %v444, %v443
        %v448 = vpack.c.bf16 %v446, %v445
        %v449 = vld [vmem:[#allocation2] sm:$0xf]
        %v450 = vld [vmem:[#allocation2 + $0x4] sm:$0xf]
        %v451 = vld [vmem:[#allocation2 + $0x8] sm:$0xf]
        %v452 = vld [vmem:[#allocation2 + $0xc] sm:$0xf]
        %v453 = vld [vmem:[#allocation2 + $0x10] sm:$0xf]
        %v454 = vld [vmem:[#allocation2 + $0x14] sm:$0xf]
        %v455 = vld [vmem:[#allocation2 + $0x18] sm:$0xf]
        %v456 = vld [vmem:[#allocation2 + $0x1c] sm:$0xf]
        %v457 = vld [vmem:[#allocation2 + $0x20] sm:$0xf]
        %v458 = vld [vmem:[#allocation2 + $0x24] sm:$0xf]
        %v459 = vld [vmem:[#allocation2 + $0x28] sm:$0xf]
        %v460 = vld [vmem:[#allocation2 + $0x2c] sm:$0xf]
        %v461 = vld [vmem:[#allocation2 + $0x30] sm:$0xf]
        %v462 = vld [vmem:[#allocation2 + $0x34] sm:$0xf]
        %v463 = vld [vmem:[#allocation2 + $0x38] sm:$0xf]
        %v464 = vld [vmem:[#allocation2 + $0x3c] sm:$0xf]
        %v465 = vld [vmem:[%s6] sm:$0x1]
        %v467 = vperm.slane %v465, 0
        %v485 = vunpack.c.l.b16 %v449
        %v486 = vunpack.c.l.b16 %v450
        %v487 = vunpack.c.l.b16 %v451
        %v488 = vunpack.c.l.b16 %v452
        %v489 = vunpack.c.l.b16 %v453
        %v490 = vunpack.c.l.b16 %v454
        %v491 = vunpack.c.l.b16 %v455
        %v492 = vunpack.c.l.b16 %v456
        %v493 = vunpack.c.l.b16 %v457
        %v494 = vunpack.c.l.b16 %v458
        %v495 = vunpack.c.l.b16 %v459
        %v496 = vunpack.c.l.b16 %v460
        %v497 = vunpack.c.l.b16 %v461
        %v498 = vunpack.c.l.b16 %v462
        %v499 = vunpack.c.l.b16 %v463
        %v500 = vunpack.c.l.b16 %v464
        %v501 = vpack.c.b16 %v486, %v485
        %v502 = vpack.c.b16 %v488, %v487
        %v503 = vpack.c.b16 %v490, %v489
        %v504 = vpack.c.b16 %v492, %v491
        %v505 = vpack.c.b16 %v494, %v493
        %v506 = vpack.c.b16 %v496, %v495
        %v507 = vpack.c.b16 %v498, %v497
        %v508 = vpack.c.b16 %v500, %v499
        %517 = vmatpush.bf16.msra.mxu0 %v508
        %518 = vmatpush.bf16.msra.mxu0 %v507
        %519 = vmatpush.bf16.msra.mxu0 %v506
        %520 = vmatpush.bf16.msra.mxu0 %v505
        %521 = vmatpush.bf16.msra.mxu0 %v504
        %522 = vmatpush.bf16.msra.mxu0 %v503
        %523 = vmatpush.bf16.msra.mxu0 %v502
        %524 = vmatpush.bf16.msra.mxu0 %v501
        %525 = vmatmul.bf16.gmra.mxu0 %v447
        %v526 = vpop.f32.mrf.mxu0
        %v527 = vadd.f32 %v467, %v526
        %v528 = vpop.f32.mrf.mxu0
        %v529 = vadd.f32 %v467, %v528
        %530 = vmatmul.bf16.gmra.mxu0 %v448
        %v531 = vpop.f32.mrf.mxu0
        %v532 = vadd.f32 %v467, %v531
        %v533 = vpop.f32.mrf.mxu0
        %v534 = vadd.f32 %v467, %v533
        %535 = vdwg.mxu0
        %v536 = vlaneseq
        %v537 = vand.u32 %v536, 127
        %vm538 = vcmp.lt.s32.totalorder %v537, 16
        %v539 = vsel %vm538, %v527, -1e+30
        %v540 = vsel %vm538, %v529, -1e+30
        %v541 = vsel %vm538, %v532, -1e+30
        %v542 = vsel %vm538, %v534, -1e+30
        %543 = vmax.xlane.f32.xlu0 %v539
        %v544 = vpop.xlane.xlu0 %543
        %545 = vmax.xlane.f32.xlu0 %v540
        %v546 = vpop.xlane.xlu0 %545
        %547 = vmax.xlane.f32.xlu0 %v541
        %v548 = vpop.xlane.xlu0 %547
        %549 = vmax.xlane.f32.xlu0 %v542
        %v550 = vpop.xlane.xlu0 %549
        %v551 = vsub.f32 %v527, %v544
        %v552 = vsub.f32 %v529, %v546
        %v553 = vsub.f32 %v532, %v548
        %v554 = vsub.f32 %v534, %v550
        %v555 = vmul.f32 %v551, 1.442695
        %v556 = vpow.pop %v555
        %v557 = vmul.f32 %v552, 1.442695
        %v558 = vpow.pop %v557
        %v559 = vmul.f32 %v553, 1.442695
        %v560 = vpow.pop %v559
        %v561 = vmul.f32 %v554, 1.442695
        %v562 = vpow.pop %v561
        %v563 = vsel %vm538, %v556, 0.0
        %v564 = vsel %vm538, %v558, 0.0
        %v565 = vsel %vm538, %v560, 0.0
        %v566 = vsel %vm538, %v562, 0.0
        %567 = vadd.xlane.f32.xlu0 %v563
        %v568 = vpop.xlane.xlu0 %567
        %569 = vadd.xlane.f32.xlu0 %v564
        %v570 = vpop.xlane.xlu0 %569
        %571 = vadd.xlane.f32.xlu0 %v565
        %v572 = vpop.xlane.xlu0 %571
        %573 = vadd.xlane.f32.xlu0 %v566
        %v574 = vpop.xlane.xlu0 %573
        %v575 = vrcp.pop %v568
        %v576 = vmul.f32 %v568, %v575
        %v577 = vsub.f32 1.0, %v576
        %v578 = vmul.f32 %v575, %v577
        %v579 = vadd.f32 %v575, %v578
        %vm580 = vweird.f32 %v568
        %vm581 = vweird.f32 %v575
        %vm582 = vmor %vm580, %vm581
        %v583 = vsel %vm582, %v575, %v579
        %v584 = vand.u32 2147483647, %v568
        %vm585 = vcmp.eq.f32.partialorder %v584, 8.507059e+37
        %v586 = vand.u32 %v568, 2147483648
        %v587 = vor.u32 1.1754944e-38, %v586
        %v588 = vsel %vm585, %v587, %v583
        %v589 = vmul.f32 %v563, %v588
        %v590 = vrcp.pop %v570
        %v591 = vmul.f32 %v570, %v590
        %v592 = vsub.f32 1.0, %v591
        %v593 = vmul.f32 %v590, %v592
        %v594 = vadd.f32 %v590, %v593
        %vm595 = vweird.f32 %v570
        %vm596 = vweird.f32 %v590
        %vm597 = vmor %vm595, %vm596
        %v598 = vsel %vm597, %v590, %v594
        %v599 = vand.u32 2147483647, %v570
        %vm600 = vcmp.eq.f32.partialorder %v599, 8.507059e+37
        %v601 = vand.u32 %v570, 2147483648
        %v602 = vor.u32 1.1754944e-38, %v601
        %v603 = vsel %vm600, %v602, %v598
        %v604 = vmul.f32 %v564, %v603
        %v605 = vrcp.pop %v572
        %v606 = vmul.f32 %v572, %v605
        %v607 = vsub.f32 1.0, %v606
        %v608 = vmul.f32 %v605, %v607
        %v609 = vadd.f32 %v605, %v608
        %vm610 = vweird.f32 %v572
        %vm611 = vweird.f32 %v605
        %vm612 = vmor %vm610, %vm611
        %v613 = vsel %vm612, %v605, %v609
        %v614 = vand.u32 2147483647, %v572
        %vm615 = vcmp.eq.f32.partialorder %v614, 8.507059e+37
        %v616 = vand.u32 %v572, 2147483648
        %v617 = vor.u32 1.1754944e-38, %v616
        %v618 = vsel %vm615, %v617, %v613
        %v619 = vmul.f32 %v565, %v618
        %v620 = vrcp.pop %v574
        %v621 = vmul.f32 %v574, %v620
        %v622 = vsub.f32 1.0, %v621
        %v623 = vmul.f32 %v620, %v622
        %v624 = vadd.f32 %v620, %v623
        %vm625 = vweird.f32 %v574
        %vm626 = vweird.f32 %v620
        %vm627 = vmor %vm625, %vm626
        %v628 = vsel %vm627, %v620, %v624
        %v629 = vand.u32 2147483647, %v574
        %vm630 = vcmp.eq.f32.partialorder %v629, 8.507059e+37
        %v631 = vand.u32 %v574, 2147483648
        %v632 = vor.u32 1.1754944e-38, %v631
        %v633 = vsel %vm630, %v632, %v628
        %v634 = vmul.f32 %v566, %v633
        %635 = vst [vmem:[%s289] sm:$0xff] %v589
        %636 = vst [vmem:[%s289 + $0x8] sm:$0xff] %v604
        %637 = vst [vmem:[%s289 + $0x10] sm:$0xff] %v619
        %638 = vst [vmem:[%s289 + $0x18] sm:$0xff] %v634
        %s639 = sand.u32 %s182, 1
        %s640 = scalar_lea.sflag [#allocation4], %s639
        %s641 = sand.u32 %s182, 1
        %s642 = smul.addr %s641, 32
        %s643 = scalar_lea.vmem [#allocation5], %s642
        // Predicated region
        $region53: #{tpu_custom_call.1} parent=47 // pred_check
          %p644 = pneg %p192
        $region54: #{tpu_custom_call.1} parent=47 // pred_check_branch
          %646 = sbr.rel (%p644) target = $region56
        $region55: #{tpu_custom_call.1} parent=47 // pred_region
          %s647 = smul.u32 4, %s22
          %649 = vsyncadd %s640, 0
          %s650 = smul.addr %s647, 8
          %s651 = scalar_lea.hbm %s7, %s650
          %s652 = sshll.u32 %s643, 4
          %s653 = int_to_ptr.vmem [resolvable:$true] %s652
          %s654 = sshll.u32 %s651, 4
          %s655 = int_to_ptr.hbm [resolvable:$true] %s654
          %660 = dma.vmem_to_hbm [thread:$0]  %s653, 512, %s655, %s640, 128, 128, 8
        $region56: #{tpu_custom_call.1} parent=47 // pred_fallthru
          _
      $region48: #{tpu_custom_call.1} parent=5 // pred_fallthru
        _
      %p661 = scmp.le.s32.totalorder 2, %s17
      // Predicated region
      $region57: #{tpu_custom_call.1} parent=5 // pred_check
        %p662 = pneg %p661
      $region58: #{tpu_custom_call.1} parent=5 // pred_check_branch
        %664 = sbr.rel (%p662) target = $region60
      $region59: #{tpu_custom_call.1} parent=5 // pred_region
        %s665 = ssub.s32 %s17, 2
        // Predicated region
        $region61: #{tpu_custom_call.1} parent=59 // pred_check
          %p666 = pneg %p198
        $region62: #{tpu_custom_call.1} parent=59 // pred_check_branch
          %668 = sbr.rel (%p666) target = $region64
        $region63: #{tpu_custom_call.1} parent=59 // pred_region
          %s669 = sand.u32 %s183, 1
          %s670 = scalar_lea.sflag [#allocation4], %s669
          %s671 = sand.u32 %s183, 1
          %s672 = smul.addr %s671, 32
          %s673 = scalar_lea.vmem [#allocation5], %s672
          %675 = dma.done %s670, 512
        $region64: #{tpu_custom_call.1} parent=59 // pred_fallthru
          _
      $region60: #{tpu_custom_call.1} parent=5 // pred_fallthru
        _
    $region6: #{tpu_custom_call.1} parent=1 // loop_footer
      %s21 = sadd.s32 1, %s17
    $region7: #{tpu_custom_call.1} parent=1 // loop_footer_branch
      %16 = sbr.rel target = $region3
    $region8: #{tpu_custom_call.1} parent=1 // loop_exit
      _
    %676 = vsyncpa [#allocation3], 1
    %s677 = scalar_lea.sflag [#allocation3], 1
    %678 = vsyncpa %s677, 1
    %679 = vsyncpa [#allocation4], 1
    %s680 = scalar_lea.sflag [#allocation4], 1
    %681 = vsyncpa %s680, 1

</llo_original>
